<compile_context>
chip_gen: v7x
topology: tpu7x:2x2x1
jax: 0.10.0
libtpu: 0.0.40
codegen_flags: <defaults>
</compile_context>

<pallas_src>
import functools

import jax
import jax.numpy as jnp
from jax.experimental import pallas as pl
from jax.experimental.pallas import tpu as pltpu


def fire_kernel(scalars_ref, w1_ref, b1_ref, w2t_ref, b2_ref, out_ref,
                *, seq, tq, nflat, eps, log_bias):
    """One grid step = bias for `tq` query rows x all `seq` keys.

    The flattened (q_local, key) index lives on the lane axis (nflat = tq * seq),
    so layer 2 is ONE [H, W] @ [W, nflat] MXU matmul (stationary [12, 32] weight,
    no per-query batching, no output permute) and the store is lane-dense.
    """
    c = scalars_ref[0]          # learnable c
    threshold = scalars_ref[1]  # |L_multiplier * init_L|

    qbase = (pl.program_id(0) * tq).astype(jnp.float32)

    # Flat lane index n = q_local * seq + k.  Decomposition via exact f32
    # arithmetic (exact for nflat, seq < 2^24); f32->s32 truncation == floor
    # for non-negative values.
    n = jax.lax.broadcasted_iota(jnp.int32, (1, nflat), 1).astype(jnp.float32)
    q_loc = ((n + 0.5) * (1.0 / seq)).astype(jnp.int32).astype(jnp.float32)
    k = n - q_loc * seq                      # key position j
    pos = qbase + q_loc                      # query position i

    # Normalized log distance (mirrors the PyTorch forward; true divide).
    # All transcendentals run on [1, nflat] rows only (per (q,k) pair, not per
    # output element) and sit on the EUP slot, hidden under VPU/MXU work.
    rel = pos - k
    abs_rel = jnp.abs(rel) + eps
    pos_norm = jnp.maximum(pos, threshold) + eps
    log_rel = jnp.log(abs_rel * c + log_bias + eps)
    log_pos = jnp.log(jnp.abs(c * pos_norm) + log_bias + eps)
    nd = log_rel / log_pos                   # [1, nflat] f32

    # Layer 1 (VPU): hidden [W, nflat], built lane-dense; cast to the MXU dtype
    # (bf16 by default: half the h traffic and MXU push count).
    h = jnp.maximum(nd * w1_ref[...] + b1_ref[...], 0.0).astype(w2t_ref.dtype)

    # Layer 2 (MXU): single 2-D matmul, f32 accumulation, output already in the
    # final [H, nflat] layout.
    acc = jnp.dot(w2t_ref[...], h, preferred_element_type=jnp.float32)
    out_ref[...] = (acc + b2_ref[...]).astype(out_ref.dtype)


def _pick_tq(seq, max_lanes):
    """Largest divisor tq of seq such that the (H, tq*seq) block is legal
    (last dim multiple of 128, or the full flat array) and tq*seq <= max_lanes."""
    divisors = [d for d in range(1, seq + 1) if seq % d == 0]
    legal = [d for d in divisors
             if (d * seq) % 128 == 0 or (d * seq) == seq * seq]
    fitting = [d for d in legal if d * seq <= max_lanes]
    if fitting:
        return max(fitting)
    # Fall back to the smallest legal block (e.g. very short sequences).
    return min(legal)


def fire_forward(x, params, *, max_lanes_per_step=32768,
                 out_dtype=jnp.float32, mxu_dtype=jnp.bfloat16):
    """x: [B, T, C] (only T is used, as in the PyTorch module). Returns [1, H, T, T].

    mxu_dtype=jnp.float32 gives a bit-faithful (slower) path for validation.
    out_dtype=jnp.bfloat16 halves the H*T*T writeback (useful on v5e).
    On v6e (128 MiB VMEM) max_lanes_per_step can be raised to 65536.
    """
    seq = x.shape[1]
    w1, b1, w2, b2, c, L_multiplier, init_L = params
    width = w1.shape[1]     # w1: [1, W]
    heads = w2.shape[1]     # w2: [W, H]
    eps = 1e-6
    fire_log_bias = 1.0

    tq = _pick_tq(seq, max_lanes_per_step)
    nflat = tq * seq
    grid = (seq // tq,)

    # Learnable scalars -> SMEM.
    threshold = jnp.abs(L_multiplier * init_L)
    scalars = jnp.stack([jnp.asarray(c), jnp.asarray(threshold)]).astype(jnp.float32)

    # Tiny parameter reshapes (done once in XLA) for the in-kernel layouts.
    w1_col = w1.reshape(width, 1).astype(jnp.float32)      # [W, 1]
    b1_col = b1.reshape(width, 1).astype(jnp.float32)      # [W, 1]
    w2t = jnp.transpose(w2).astype(mxu_dtype)               # [H, W]
    b2_col = b2.reshape(heads, 1).astype(jnp.float32)       # [H, 1]

    kernel = functools.partial(fire_kernel, seq=seq, tq=tq, nflat=nflat,
                               eps=eps, log_bias=fire_log_bias)

    out_flat = pl.pallas_call(
        kernel,
        out_shape=jax.ShapeDtypeStruct((heads, seq * seq), out_dtype),
        grid=grid,
        in_specs=[
            pl.BlockSpec(memory_space=pltpu.MemorySpace.SMEM),       # [c, threshold]
            pl.BlockSpec((width, 1), lambda i: (0, 0)),              # W1 as [W, 1]
            pl.BlockSpec((width, 1), lambda i: (0, 0)),              # b1 as [W, 1]
            pl.BlockSpec((heads, width), lambda i: (0, 0)),          # W2^T [H, W]
            pl.BlockSpec((heads, 1), lambda i: (0, 0)),              # b2 as [H, 1]
        ],
        out_specs=pl.BlockSpec((heads, nflat), lambda i: (0, i)),
        compiler_params=pltpu.CompilerParams(
            dimension_semantics=("parallel",),
            # < v7x's 64 MiB physical VMEM, with headroom for Mosaic scratch.
            vmem_limit_bytes=40 * 1024 * 1024,
        ),
    )(scalars, w1_col, b1_col, w2t, b2_col)

    # [H, T*T] -> [H, T, T] -> [1, H, T, T]: metadata-only (row-major split + expand),
    # no HBM transpose (matches .unsqueeze(0).permute(0, 3, 1, 2)).
    return out_flat.reshape(heads, seq, seq)[None, ...]


def fire_reference(x, params):
    """Pure-JAX reference matching the PyTorch forward exactly."""
    seq = x.shape[1]
    w1, b1, w2, b2, c, L_multiplier, init_L = params
    eps = 1e-6
    fire_log_bias = 1.0

    positions = jnp.arange(seq, dtype=jnp.float32)
    rel = positions[:, None] - positions[None, :]
    abs_rel = jnp.abs(rel) + eps
    threshold = jnp.abs(L_multiplier * init_L)
    pos_norm = jnp.maximum(positions, threshold)[:, None] + eps
    log_rel = jnp.log(abs_rel * c + fire_log_bias + eps)
    log_pos = jnp.log(jnp.abs(c * pos_norm) + fire_log_bias + eps)
    nd = log_rel / log_pos                                          # [T, T]
    h = jnp.maximum(nd[..., None] * w1[0][None, None, :] + b1, 0.0)  # [T, T, W]
    out = jnp.einsum('qkw,wh->hqk', h, w2,
                     precision=jax.lax.Precision.HIGHEST) + b2[:, None, None]
    return out[None, ...]


def init_params(key, width=32, heads=12, init_c=0.1, init_L=512.0):
    k1, k2, k3, k4 = jax.random.split(key, 4)
    w1 = jax.random.normal(k1, (1, width), jnp.float32) * 0.5
    b1 = jax.random.normal(k2, (width,), jnp.float32) * 0.1
    w2 = jax.random.normal(k3, (width, heads), jnp.float32) * (1.0 / jnp.sqrt(width))
    b2 = jax.random.normal(k4, (heads,), jnp.float32) * 0.1
    c = jnp.float32(init_c)
    L_multiplier = jnp.float32(1.0)
    init_L_p = jnp.float32(init_L)
    return (w1, b1, w2, b2, c, L_multiplier, init_L_p)


if __name__ == "__main__":
    key = jax.random.PRNGKey(0)
    pkey, xkey = jax.random.split(key)

    batch, seq, n_embd = 2, 16, 32
    x = jax.random.normal(xkey, (batch, seq, n_embd), jnp.float32)
    params = init_params(pkey, width=32, heads=12)

    ref = fire_reference(x, params)

    # Default (performance) path: bf16 MXU operands, f32 accumulation.
    out = jax.block_until_ready(fire_forward(x, params))
    assert out.shape == (1, 12, seq, seq), out.shape
    assert jnp.allclose(out, ref, atol=2e-2, rtol=2e-2), "bf16-MXU path mismatch vs reference"

    # Strict semantic check with f32 MXU operands.
    out_f32 = jax.block_until_ready(fire_forward(x, params, mxu_dtype=jnp.float32))
    assert jnp.allclose(out_f32, ref, atol=1e-3, rtol=1e-3), "f32 path mismatch vs reference"

    print("KERNEL_OK")
</pallas_src>

<mosaic_0001>
module attributes {stable_mosaic.version = 11 : i64} {
  func.func @fire_kernel(%arg0: i32, %arg1: memref<2xf32, #tpu.memory_space<smem>>, %arg2: memref<32x1xf32, #tpu.memory_space<vmem>>, %arg3: memref<32x1xf32, #tpu.memory_space<vmem>>, %arg4: memref<12x32xbf16, #tpu.memory_space<vmem>>, %arg5: memref<12x1xf32, #tpu.memory_space<vmem>>, %arg6: memref<12x256xf32, #tpu.memory_space<vmem>>) attributes {dimension_semantics = [#tpu.dimension_semantics<parallel>], iteration_bounds = array<i64: 1>, scalar_prefetch = 0 : i64, scratch_operands = 0 : i64, tpu.core_type = #tpu.core_type<tc>, window_params = [{transform_indices = @transform_0, window_bounds = array<i64: 2>}, {pipeline_mode = #tpu.pipeline_mode<synchronous>, transform_indices = @transform_1, window_bounds = array<i64: 32, 1>}, {pipeline_mode = #tpu.pipeline_mode<synchronous>, transform_indices = @transform_2, window_bounds = array<i64: 32, 1>}, {pipeline_mode = #tpu.pipeline_mode<synchronous>, transform_indices = @transform_3, window_bounds = array<i64: 12, 32>}, {pipeline_mode = #tpu.pipeline_mode<synchronous>, transform_indices = @transform_4, window_bounds = array<i64: 12, 1>}, {transform_indices = @transform_5, window_bounds = array<i64: 12, 256>}]} {
    %c0 = arith.constant 0 : index
    %0 = memref.load %arg1[%c0] : memref<2xf32, #tpu.memory_space<smem>>
    %c1 = arith.constant 1 : index
    %1 = memref.load %arg1[%c1] : memref<2xf32, #tpu.memory_space<smem>>
    %c16_i32 = arith.constant 16 : i32
    %2 = arith.muli %arg0, %c16_i32 : i32
    %3 = arith.sitofp %2 : i32 to f32
    %4 = tpu.iota {dimensions = array<i32: 1>} : vector<1x256xi32>
    %5 = arith.sitofp %4 : vector<1x256xi32> to vector<1x256xf32>
    %cst = arith.constant 5.000000e-01 : f32
    %6 = vector.broadcast %cst : f32 to vector<1x256xf32>
    %7 = arith.addf %5, %6 : vector<1x256xf32>
    %cst_0 = arith.constant 6.250000e-02 : f32
    %8 = vector.broadcast %cst_0 : f32 to vector<1x256xf32>
    %9 = arith.mulf %7, %8 : vector<1x256xf32>
    %10 = arith.fptosi %9 : vector<1x256xf32> to vector<1x256xi32>
    %11 = arith.sitofp %10 : vector<1x256xi32> to vector<1x256xf32>
    %cst_1 = arith.constant 1.600000e+01 : f32
    %12 = vector.broadcast %cst_1 : f32 to vector<1x256xf32>
    %13 = arith.mulf %11, %12 : vector<1x256xf32>
    %14 = arith.subf %5, %13 : vector<1x256xf32>
    %15 = vector.broadcast %3 : f32 to vector<1x256xf32>
    %16 = arith.addf %15, %11 : vector<1x256xf32>
    %17 = arith.subf %16, %14 : vector<1x256xf32>
    %18 = math.absf %17 : vector<1x256xf32>
    %cst_2 = arith.constant 9.99999997E-7 : f32
    %19 = vector.broadcast %cst_2 : f32 to vector<1x256xf32>
    %20 = arith.addf %18, %19 : vector<1x256xf32>
    %21 = vector.broadcast %1 : f32 to vector<1x256xf32>
    %22 = arith.maximumf %16, %21 : vector<1x256xf32>
    %cst_3 = arith.constant 9.99999997E-7 : f32
    %23 = vector.broadcast %cst_3 : f32 to vector<1x256xf32>
    %24 = arith.addf %22, %23 : vector<1x256xf32>
    %25 = vector.broadcast %0 : f32 to vector<1x256xf32>
    %26 = arith.mulf %20, %25 : vector<1x256xf32>
    %cst_4 = arith.constant 1.000000e+00 : f32
    %27 = vector.broadcast %cst_4 : f32 to vector<1x256xf32>
    %28 = arith.addf %26, %27 : vector<1x256xf32>
    %cst_5 = arith.constant 9.99999997E-7 : f32
    %29 = vector.broadcast %cst_5 : f32 to vector<1x256xf32>
    %30 = arith.addf %28, %29 : vector<1x256xf32>
    %31 = math.log %30 : vector<1x256xf32>
    %32 = vector.broadcast %0 : f32 to vector<1x256xf32>
    %33 = arith.mulf %32, %24 : vector<1x256xf32>
    %34 = math.absf %33 : vector<1x256xf32>
    %cst_6 = arith.constant 1.000000e+00 : f32
    %35 = vector.broadcast %cst_6 : f32 to vector<1x256xf32>
    %36 = arith.addf %34, %35 : vector<1x256xf32>
    %cst_7 = arith.constant 9.99999997E-7 : f32
    %37 = vector.broadcast %cst_7 : f32 to vector<1x256xf32>
    %38 = arith.addf %36, %37 : vector<1x256xf32>
    %39 = math.log %38 : vector<1x256xf32>
    %40 = arith.divf %31, %39 : vector<1x256xf32>
    %c0_8 = arith.constant 0 : index
    %c0_9 = arith.constant 0 : index
    %41 = vector.load %arg2[%c0_8, %c0_9] : memref<32x1xf32, #tpu.memory_space<vmem>>, vector<32x1xf32>
    %42 = vector.broadcast %40 : vector<1x256xf32> to vector<32x256xf32>
    %43 = vector.broadcast %41 : vector<32x1xf32> to vector<32x256xf32>
    %44 = arith.mulf %42, %43 : vector<32x256xf32>
    %c0_10 = arith.constant 0 : index
    %c0_11 = arith.constant 0 : index
    %45 = vector.load %arg3[%c0_10, %c0_11] : memref<32x1xf32, #tpu.memory_space<vmem>>, vector<32x1xf32>
    %46 = vector.broadcast %45 : vector<32x1xf32> to vector<32x256xf32>
    %47 = arith.addf %44, %46 : vector<32x256xf32>
    %cst_12 = arith.constant 0.000000e+00 : f32
    %48 = vector.broadcast %cst_12 : f32 to vector<32x256xf32>
    %49 = arith.maximumf %47, %48 : vector<32x256xf32>
    %50 = arith.truncf %49 : vector<32x256xf32> to vector<32x256xbf16>
    %c0_13 = arith.constant 0 : index
    %c0_14 = arith.constant 0 : index
    %51 = vector.load %arg4[%c0_13, %c0_14] : memref<12x32xbf16, #tpu.memory_space<vmem>>, vector<12x32xbf16>
    %cst_15 = arith.constant dense<0.000000e+00> : vector<12x256xf32>
    %52 = tpu.matmul %51, %50, %cst_15 {dimension_numbers = #tpu.dot_dimension_numbers<[1], [0], [0], [1], [0, 0, 1, 1], [], []>} : vector<12x32xbf16>, vector<32x256xbf16>, vector<12x256xf32> -> vector<12x256xf32>
    %c0_16 = arith.constant 0 : index
    %c0_17 = arith.constant 0 : index
    %53 = vector.load %arg5[%c0_16, %c0_17] : memref<12x1xf32, #tpu.memory_space<vmem>>, vector<12x1xf32>
    %54 = vector.broadcast %53 : vector<12x1xf32> to vector<12x256xf32>
    %55 = arith.addf %52, %54 : vector<12x256xf32>
    %c0_18 = arith.constant 0 : index
    %c0_19 = arith.constant 0 : index
    %56 = vector.load %arg6[%c0_18, %c0_19] : memref<12x256xf32, #tpu.memory_space<vmem>>, vector<12x256xf32>
    tpu.vector_store %arg6[%c0_18, %c0_19], %55 {strides = array<i32>} : memref<12x256xf32, #tpu.memory_space<vmem>>, vector<12x256xf32>,
    return
  }
  func.func @transform_0(%arg0: i32) -> i32 {
    %c0_i32 = arith.constant 0 : i32
    %c0_i32_0 = arith.constant 0 : i32
    return %c0_i32 : i32
  }
  func.func @transform_1(%arg0: i32) -> (i32, i32) {
    %c0_i32 = arith.constant 0 : i32
    %c0_i32_0 = arith.constant 0 : i32
    %c0_i32_1 = arith.constant 0 : i32
    return %c0_i32, %c0_i32_0 : i32, i32
  }
  func.func @transform_2(%arg0: i32) -> (i32, i32) {
    %c0_i32 = arith.constant 0 : i32
    %c0_i32_0 = arith.constant 0 : i32
    %c0_i32_1 = arith.constant 0 : i32
    return %c0_i32, %c0_i32_0 : i32, i32
  }
  func.func @transform_3(%arg0: i32) -> (i32, i32) {
    %c0_i32 = arith.constant 0 : i32
    %c0_i32_0 = arith.constant 0 : i32
    %c0_i32_1 = arith.constant 0 : i32
    return %c0_i32, %c0_i32_0 : i32, i32
  }
  func.func @transform_4(%arg0: i32) -> (i32, i32) {
    %c0_i32 = arith.constant 0 : i32
    %c0_i32_0 = arith.constant 0 : i32
    %c0_i32_1 = arith.constant 0 : i32
    return %c0_i32, %c0_i32_0 : i32, i32
  }
  func.func @transform_5(%arg0: i32) -> (i32, i32) {
    %c0_i32 = arith.constant 0 : i32
    %c0_i32_0 = arith.constant 0 : i32
    return %c0_i32, %arg0 : i32, i32
  }
}

</mosaic_0001>

<llo_original>
// kernel: tpu_custom_call.1
$region0: #{tpu_custom_call.1}
  #allocation0 [shape = 'u32[]', space=smem, size = 0x4, offset = 0x4, fixed_abs, tag = 'smem constant byte address 0x4 - core index']
  #allocation1 [shape = 'u32[144,128]{1,0:T(1,128)}', space=vmem, size = 0x12000, scoped, tag = 'internal scratch']
  %s0 = inlined_call_operand.vmem [shape: f32[2], index: 0, kind: input, shape index: {}]
  %s1 = inlined_call_operand.vmem [shape: f32[32,1], index: 1, kind: input, shape index: {}]
  %s2 = inlined_call_operand.vmem [shape: f32[32,1], index: 2, kind: input, shape index: {}]
  %s3 = inlined_call_operand.vmem [shape: bf16[12,32], index: 3, kind: input, shape index: {}]
  %s4 = inlined_call_operand.vmem [shape: f32[12,1], index: 4, kind: input, shape index: {}]
  %s5 = inlined_call_operand.hbm [shape: f32[12,256], index: 5, kind: output, shape index: {}]
  %s6 = sld [smem:[#allocation0]]
  $region34: #{tpu_custom_call.1} parent=0
    _
  %s8 = ssub.s32 1, %s6
  %s9 = scalar_select 0, %s8, %s6
  $region1: #{tpu_custom_call.1} parent=0
    #allocation2 [shape = 'u8[512]{0}', space=smem, size = 0x200, scoped, tag = 'input window, operand 0, single buffered']
    #allocation3 [shape = 's32[1]{0}', space=sflag, size = 0x4, scoped, tag = 'scoped memory for tpu_custom_call.1']
    #allocation4 [shape = 's32[1]{0}', space=sflag, size = 0x4, scoped, tag = 'scoped memory for tpu_custom_call.1']
    #allocation5 [shape = 'u8[16384]{0}', space=vmem, size = 0x4000, scoped, tag = 'output window, operand 0, single buffered']
    %10 = vsyncpa [#allocation4], 0
    %11 = vsyncpa [#allocation3], 0
    // Predicated region
    $region2: #{tpu_custom_call.1} parent=1 // pred_check
      _
    $region3: #{tpu_custom_call.1} parent=1 // pred_check_branch
      %13 = sbr.rel (0) target = $region5
    $region4: #{tpu_custom_call.1} parent=1 // pred_region
      %s15 = ssub.s32 16, 16
      %16 = vsyncadd [#allocation4], %s15
      %s18 = sshll.u32 %s0, 4
      %s19 = int_to_ptr.vmem [resolvable:$true] %s18
      %21 = dma.vmem_to_smem %s19, 16, [#allocation2], [#allocation4]
    $region5: #{tpu_custom_call.1} parent=1 // pred_fallthru
      _
    // Predicated region
    $region6: #{tpu_custom_call.1} parent=1 // pred_check
      _
    $region7: #{tpu_custom_call.1} parent=1 // pred_check_branch
      %23 = sbr.rel (0) target = $region9
    $region8: #{tpu_custom_call.1} parent=1 // pred_region
      _
    $region9: #{tpu_custom_call.1} parent=1 // pred_fallthru
      _
    // Predicated region
    $region10: #{tpu_custom_call.1} parent=1 // pred_check
      _
    $region11: #{tpu_custom_call.1} parent=1 // pred_check_branch
      %25 = sbr.rel (0) target = $region13
    $region12: #{tpu_custom_call.1} parent=1 // pred_region
      _
    $region13: #{tpu_custom_call.1} parent=1 // pred_fallthru
      _
    // Predicated region
    $region14: #{tpu_custom_call.1} parent=1 // pred_check
      _
    $region15: #{tpu_custom_call.1} parent=1 // pred_check_branch
      %27 = sbr.rel (0) target = $region17
    $region16: #{tpu_custom_call.1} parent=1 // pred_region
      _
    $region17: #{tpu_custom_call.1} parent=1 // pred_fallthru
      _
    // Predicated region
    $region18: #{tpu_custom_call.1} parent=1 // pred_check
      _
    $region19: #{tpu_custom_call.1} parent=1 // pred_check_branch
      %29 = sbr.rel (0) target = $region21
    $region20: #{tpu_custom_call.1} parent=1 // pred_region
      _
    $region21: #{tpu_custom_call.1} parent=1 // pred_fallthru
      _
    // Predicated region
    $region22: #{tpu_custom_call.1} parent=1 // pred_check
      _
    $region23: #{tpu_custom_call.1} parent=1 // pred_check_branch
      %31 = sbr.rel (0) target = $region25
    $region24: #{tpu_custom_call.1} parent=1 // pred_region
      %32 = dma.done [#allocation4], 16
    $region25: #{tpu_custom_call.1} parent=1 // pred_fallthru
      _
    %33 = sfence
    %s35 = sld [smem:[#allocation2]]
    %s36 = sld [smem:[#allocation2 + $0x1]]
    %s37 = smul.u32 0, 16
    %s38 = scvt.s32.f32 %s37
    %v39 = vlaneseq
    %v40 = vand.u32 %v39, 127
    %v41 = vadd.s32 %v40, 128
    %v42 = vcvt.s32.f32 %v40
    %v43 = vcvt.s32.f32 %v41
    %v44 = vadd.f32 %v42, 0.5
    %v45 = vadd.f32 %v43, 0.5
    %v46 = vmul.f32 %v44, 0.0625
    %v47 = vmul.f32 %v45, 0.0625
    %v48 = vcvt.f32.s32.to.zero.pseudo %v46
    %v49 = vcvt.f32.s32.to.zero.pseudo %v47
    %v50 = vcvt.s32.f32 %v48
    %v51 = vcvt.s32.f32 %v49
    %v52 = vmul.f32 %v50, 16.0
    %v53 = vmul.f32 %v51, 16.0
    %v54 = vsub.f32 %v42, %v52
    %v55 = vsub.f32 %v43, %v53
    %v56 = vstv %s38
    %v57 = vadd.f32 %v56, %v50
    %v58 = vadd.f32 %v56, %v51
    %v59 = vsub.f32 %v57, %v54
    %v60 = vsub.f32 %v58, %v55
    %v61 = vand.u32 2147483647, %v59
    %v62 = vand.u32 2147483647, %v60
    %v63 = vadd.f32 %v61, 1e-06
    %v64 = vadd.f32 %v62, 1e-06
    %v65 = vstv %s36
    %v66 = vmax.f32 %v57, %v65
    %v67 = vmax.f32 %v58, %v65
    %v68 = vadd.f32 %v66, 1e-06
    %v69 = vadd.f32 %v67, 1e-06
    %v70 = vstv %s35
    %v71 = vmul.f32 %v63, %v70
    %v72 = vmul.f32 %v64, %v70
    %v73 = vadd.f32 %v71, 1.0
    %v74 = vadd.f32 %v72, 1.0
    %v75 = vadd.f32 %v73, 1e-06
    %v76 = vadd.f32 %v74, 1e-06
    %v77 = vlog2.pop %v75
    %v78 = vmul.f32 %v77, 0.6931472
    %v79 = vlog2.pop %v76
    %v80 = vmul.f32 %v79, 0.6931472
    %v81 = vmul.f32 %v70, %v68
    %v82 = vmul.f32 %v70, %v69
    %v83 = vand.u32 2147483647, %v81
    %v84 = vand.u32 2147483647, %v82
    %v85 = vadd.f32 %v83, 1.0
    %v86 = vadd.f32 %v84, 1.0
    %v87 = vadd.f32 %v85, 1e-06
    %v88 = vadd.f32 %v86, 1e-06
    %v89 = vlog2.pop %v87
    %v90 = vmul.f32 %v89, 0.6931472
    %v91 = vlog2.pop %v88
    %v92 = vmul.f32 %v91, 0.6931472
    %v93 = vrcp.pop %v90
    %v94 = vmul.f32 %v78, %v93
    %v95 = vrcp.pop %v92
    %v96 = vmul.f32 %v80, %v95
    %v97 = vld [vmem:[%s1] sm:$0xff]
    %v98 = vld [vmem:[%s1 + $0x8] sm:$0xff]
    %v99 = vld [vmem:[%s1 + $0x10] sm:$0xff]
    %v100 = vld [vmem:[%s1 + $0x18] sm:$0xff]
    %102 = vset.pattern.permute.xlu0 0
    %103 = vperm.xlu0 %102, %v97
    %v104 = vpop.permute.xlu0 %103
    %107 = vset.pattern.permute.xlu0 0
    %108 = vperm.xlu0 %107, %v98
    %v109 = vpop.permute.xlu0 %108
    %112 = vset.pattern.permute.xlu0 0
    %113 = vperm.xlu0 %112, %v99
    %v114 = vpop.permute.xlu0 %113
    %117 = vset.pattern.permute.xlu0 0
    %118 = vperm.xlu0 %117, %v100
    %v119 = vpop.permute.xlu0 %118
    %v121 = vmul.f32 %v94, %v104
    %v122 = vmul.f32 %v96, %v104
    %v123 = vmul.f32 %v94, %v109
    %v124 = vmul.f32 %v96, %v109
    %v125 = vmul.f32 %v94, %v114
    %v126 = vmul.f32 %v96, %v114
    %v127 = vmul.f32 %v94, %v119
    %v128 = vmul.f32 %v96, %v119
    %v129 = vld [vmem:[%s2] sm:$0xff]
    %v130 = vld [vmem:[%s2 + $0x8] sm:$0xff]
    %v131 = vld [vmem:[%s2 + $0x10] sm:$0xff]
    %v132 = vld [vmem:[%s2 + $0x18] sm:$0xff]
    %134 = vset.pattern.permute.xlu0 0
    %135 = vperm.xlu0 %134, %v129
    %v136 = vpop.permute.xlu0 %135
    %139 = vset.pattern.permute.xlu0 0
    %140 = vperm.xlu0 %139, %v130
    %v141 = vpop.permute.xlu0 %140
    %144 = vset.pattern.permute.xlu0 0
    %145 = vperm.xlu0 %144, %v131
    %v146 = vpop.permute.xlu0 %145
    %149 = vset.pattern.permute.xlu0 0
    %150 = vperm.xlu0 %149, %v132
    %v151 = vpop.permute.xlu0 %150
    %v153 = vadd.f32 %v121, %v136
    %v154 = vadd.f32 %v122, %v136
    %v155 = vadd.f32 %v123, %v141
    %v156 = vadd.f32 %v124, %v141
    %v157 = vadd.f32 %v125, %v146
    %v158 = vadd.f32 %v126, %v146
    %v159 = vadd.f32 %v127, %v151
    %v160 = vadd.f32 %v128, %v151
    %v161 = vmax.f32 %v153, 0.0
    %v162 = vmax.f32 %v154, 0.0
    %v163 = vmax.f32 %v155, 0.0
    %v164 = vmax.f32 %v156, 0.0
    %v165 = vmax.f32 %v157, 0.0
    %v166 = vmax.f32 %v158, 0.0
    %v167 = vmax.f32 %v159, 0.0
    %v168 = vmax.f32 %v160, 0.0
    %v169 = vpack.c.bf16 %v163, %v161
    %v170 = vpack.c.bf16 %v164, %v162
    %v171 = vpack.c.bf16 %v167, %v165
    %v172 = vpack.c.bf16 %v168, %v166
    %v173 = vld [vmem:[%s3] sm:$0xf]
    %v174 = vld [vmem:[%s3 + $0x4] sm:$0x3]
    %v175 = vld [vmem:[%s4] sm:$0xff]
    %v176 = vld [vmem:[%s4 + $0x8] sm:$0xf]
    %178 = vset.pattern.permute.xlu0 0
    %179 = vperm.xlu0 %178, %v175
    %v180 = vpop.permute.xlu0 %179
    %183 = vset.pattern.permute.xlu0 0
    %184 = vperm.xlu0 %183, %v176
    %v185 = vpop.permute.xlu0 %184
    %v189 = vunpack.c.l.b16 %v173
    %v190 = vunpack.c.l.b16 %v174
    %v191 = vpack.c.b16 %v190, %v189
    %vm192 = vcmask 261120
    %v194 = vsel %vm192, %v191, 0
    %196 = vmatprep.subr.bf16.mxu0 %v170
    %197 = vmatpush1.bf16.msra.mxu0 %v169
    %198 = vmatprep.subr.bf16.mxu0 %v172
    %199 = vmatpush1.bf16.msra.mxu0 %v171
    %200 = vmatprep.subr.bf16.mxu0 0
    %201 = vmatpush1.bf16.msra.mxu0 0
    %202 = vmatprep.subr.bf16.mxu0 0
    %203 = vmatpush1.bf16.msra.mxu0 0
    %204 = vmatprep.subr.bf16.mxu0 0
    %205 = vmatpush1.bf16.msra.mxu0 0
    %206 = vmatprep.subr.bf16.mxu0 0
    %207 = vmatpush1.bf16.msra.mxu0 0
    %208 = vmatprep.subr.bf16.mxu0 0
    %209 = vmatpush1.bf16.msra.mxu0 0
    %210 = vmatprep.subr.bf16.mxu0 0
    %211 = vmatpush1.bf16.msra.mxu0 0
    %212 = vmatprep.subr.bf16.mxu0 0
    %213 = vmatpush1.bf16.msra.mxu0 0
    %214 = vmatprep.subr.bf16.mxu0 0
    %215 = vmatpush1.bf16.msra.mxu0 0
    %216 = vmatprep.subr.bf16.mxu0 0
    %217 = vmatpush1.bf16.msra.mxu0 0
    %218 = vmatprep.subr.bf16.mxu0 0
    %219 = vmatpush1.bf16.msra.mxu0 0
    %220 = vmatprep.subr.bf16.mxu0 0
    %221 = vmatpush1.bf16.msra.mxu0 0
    %222 = vmatprep.subr.bf16.mxu0 0
    %223 = vmatpush1.bf16.msra.mxu0 0
    %224 = vmatprep.subr.bf16.mxu0 0
    %225 = vmatpush1.bf16.msra.mxu0 0
    %226 = vmatprep.subr.bf16.mxu0 0
    %227 = vmatpush1.bf16.msra.mxu0 0
    %228 = vmatprep.mubr.bf16.mxu0 0
    %229 = vmatmul.mubr.bf16.gmra.mrb[0].mxu0 %v194
    %v230 = vpop.f32.mrb[0].mxu0
    %v231 = vadd.f32 %v180, %v230
    %v232 = vpop.f32.mrb[0].mxu0
    %v233 = vadd.f32 %v180, %v232
    %v234 = vpop.f32.mrb[0].mxu0
    %v235 = vadd.f32 %v185, %v234
    %v236 = vpop.f32.mrb[0].mxu0
    %v237 = vadd.f32 %v185, %v236
    %238 = vdwg.mxu0
    %239 = vst [vmem:[#allocation5] sm:$0xff] %v231
    %240 = vst [vmem:[#allocation5 + $0x8] sm:$0xff] %v233
    %241 = vst [vmem:[#allocation5 + $0x10] sm:$0xf] %v235
    %242 = vst [vmem:[#allocation5 + $0x18] sm:$0xf] %v237
    // Predicated region
    $region26: #{tpu_custom_call.1} parent=1 // pred_check
      _
    $region27: #{tpu_custom_call.1} parent=1 // pred_check_branch
      %244 = sbr.rel (0) target = $region29
    $region28: #{tpu_custom_call.1} parent=1 // pred_region
      %s246 = ssub.s32 512, 512
      %247 = vsyncadd [#allocation3], %s246
      %s248 = sshll.u32 [#allocation5], 4
      %s249 = int_to_ptr.vmem [resolvable:$true] %s248
      %254 = dma.vmem_to_hbm [thread:$0]  %s249, 512, %s5, [#allocation3], 256, 256, 16
    $region29: #{tpu_custom_call.1} parent=1 // pred_fallthru
      _
    // Predicated region
    $region30: #{tpu_custom_call.1} parent=1 // pred_check
      _
    $region31: #{tpu_custom_call.1} parent=1 // pred_check_branch
      %256 = sbr.rel (0) target = $region33
    $region32: #{tpu_custom_call.1} parent=1 // pred_region
      %257 = dma.done [#allocation3], 512
    $region33: #{tpu_custom_call.1} parent=1 // pred_fallthru
      _
    %258 = vsyncpa [#allocation3], 1
    %259 = vsyncpa [#allocation4], 1

</llo_original>
